<compile_context>
chip_gen: v7x
topology: tpu7x:2x2x1
jax: 0.10.0
libtpu: 0.0.40
codegen_flags: <defaults>
</compile_context>

<pallas_src>
import jax
import jax.numpy as jnp
from jax import lax
from jax.experimental import pallas as pl
from jax.experimental.pallas import tpu as pltpu


_EPS = 1e-12           # torch.nn.functional.normalize default eps
_EPS_SQ = _EPS * _EPS  # clamp applied to the squared norms


# --------------------------------------------------------------------------- #
# Kernel                                                                      #
# --------------------------------------------------------------------------- #
def _byol_tiled_kernel(s_ref, t_ref, o_ref, ss_ref, tt_ref, st_ref, acc_ref):
    """One (tb, td) tile of the swapped (student, teacher) pairing.

    Grid = (2, nb, nd):
      p = program_id(0): half-pairing (s1.t2 vs s2.t1)   -- "parallel"
      j = program_id(1): row block inside the half       -- "arbitrary"
      k = program_id(2): feature (D) chunk               -- "arbitrary"
    Iteration order on a single core is p-outer / j / k-inner (Pallas default),
    which the j==0 / k==0 resets rely on.  On v7x the "parallel" p axis gives
    each TensorCore its own copy of every scratch buffer.
    """
    j = pl.program_id(1)
    k = pl.program_id(2)
    nj = pl.num_programs(1)
    nk = pl.num_programs(2)

    @pl.when(jnp.logical_and(j == 0, k == 0))
    def _():
        acc_ref[...] = jnp.zeros_like(acc_ref)

    @pl.when(k == 0)
    def _():
        ss_ref[...] = jnp.zeros_like(ss_ref)
        tt_ref[...] = jnp.zeros_like(tt_ref)
        st_ref[...] = jnp.zeros_like(st_ref)

    s = s_ref[...].astype(jnp.float32)
    t = t_ref[...].astype(jnp.float32)

    # Partial per-row reductions over this D chunk (lane reductions -> XLU).
    ss_ref[...] += jnp.sum(s * s, axis=-1, keepdims=True)   # [tb, 1]
    tt_ref[...] += jnp.sum(t * t, axis=-1, keepdims=True)   # [tb, 1]
    st_ref[...] += jnp.sum(s * t, axis=-1, keepdims=True)   # [tb, 1]

    @pl.when(k == nk - 1)
    def _():
        eps2 = jnp.float32(_EPS_SQ)
        # Fused F.normalize: st / (max(|s|,eps) * max(|t|,eps)); rsqrt -> EUP.
        cos = (st_ref[...]
               * lax.rsqrt(jnp.maximum(ss_ref[...], eps2))
               * lax.rsqrt(jnp.maximum(tt_ref[...], eps2)))
        acc_ref[...] += jnp.sum(cos, axis=0, keepdims=True)  # (1, 1) running sum

    @pl.when(jnp.logical_and(j == nj - 1, k == nk - 1))
    def _():
        # Lane-dense write of this half's partial sum (whole (1,128) block).
        o_ref[...] = jnp.broadcast_to(acc_ref[...], o_ref.shape)


# --------------------------------------------------------------------------- #
# Tile selection helpers                                                      #
# --------------------------------------------------------------------------- #
def _round_up(x, m):
    return ((x + m - 1) // m) * m


def _bytes_per_step(tb, td, itemsize):
    # 2 inputs x 2 pipeline buffers at the input dtype, plus headroom for the
    # in-kernel f32 upcast temporaries (s, t and one product/reduction tile).
    return 2 * 2 * tb * td * itemsize + 3 * tb * td * 4


def _largest_row_tile(b_pad, td, itemsize, row_align, max_rows, budget):
    """Largest multiple-of-row_align divisor of b_pad fitting the VMEM budget.

    tb == b_pad (single block per half) is allowed when it fits.
    """
    best = row_align
    limit = min(b_pad, max_rows)
    tb = row_align
    while tb <= limit:
        if b_pad % tb == 0 and _bytes_per_step(tb, td, itemsize) <= budget:
            best = tb
        tb += row_align
    return best


def _largest_d_tile(d_pad, itemsize, row_align, budget):
    """Largest multiple-of-128 divisor of d_pad whose minimal row tile fits."""
    best = 128
    for m in range(1, d_pad // 128 + 1):
        td = 128 * m
        if d_pad % td == 0 and _bytes_per_step(row_align, td, itemsize) <= budget:
            best = td
    return best


def _pad_half_rows(x, b, pad):
    """Pad each half (stacked along axis 0) with `pad` zero rows."""
    z = jnp.zeros((pad,) + x.shape[1:], x.dtype)
    return jnp.concatenate([x[:b], z, x[b:], z], axis=0)


# --------------------------------------------------------------------------- #
# Wrapper                                                                     #
# --------------------------------------------------------------------------- #
def byol_loss(student_output, teacher_output, *, max_block_rows=4096,
              block_budget_bytes=None):
    """Pallas BYOL loss.  Inputs: [2B, D].  Returns scalar float32 loss."""
    assert student_output.shape == teacher_output.shape
    two_b, d = student_output.shape
    assert two_b % 2 == 0, "first dim must be 2*B (two augmented views)"
    b = two_b // 2
    itemsize = jnp.dtype(student_output.dtype).itemsize

    # Dtype-aware row alignment: sub-32-bit dtypes pack along sublanes
    # (bf16 -> 16 rows, int8/fp8 -> 32 rows) so tiles stay fully packed.
    row_align = max(8, 32 // max(itemsize, 1))

    # Generation-aware VMEM budgets: ~3/4 of physical VMEM as the Mosaic limit
    # (48 MiB on v7x's 64 MiB, capped at 96 MiB on v5e/v6e's 128 MiB) and half
    # of that for the double-buffered input tiles + f32 upcast headroom.
    try:
        vmem_cap = int(pltpu.get_tpu_info().vmem_capacity_bytes)
    except Exception:  # pragma: no cover - conservative (v7x-sized) fallback
        vmem_cap = 64 * 1024 * 1024
    vmem_limit = min((vmem_cap * 3) // 4, 96 * 1024 * 1024)
    budget = block_budget_bytes if block_budget_bytes is not None else vmem_limit // 2

    # Ragged half-batch: pad each half with zero rows up to the alignment.
    # Zero rows give ss = tt = st = 0 -> cos = 0, contributing nothing; the
    # final mean divides by the true B, so the result is exact.
    b_pad = _round_up(b, row_align)
    if b_pad != b:
        pad = b_pad - b
        student_output = _pad_half_rows(student_output, b, pad)
        teacher_output = _pad_half_rows(teacher_output, b, pad)

    # Feature (D) chunking only when a minimal full-D row block would blow the
    # budget (very wide projector dims).  Zero-padded columns also contribute 0.
    d_pad = d
    if _bytes_per_step(row_align, d, itemsize) > budget:
        d_pad = _round_up(d, 128)
        if d_pad != d:
            pads = ((0, 0), (0, d_pad - d))
            student_output = jnp.pad(student_output, pads)
            teacher_output = jnp.pad(teacher_output, pads)
        td = _largest_d_tile(d_pad, itemsize, row_align, budget)
    else:
        td = d_pad
    nd = d_pad // td

    tb = _largest_row_tile(b_pad, td, itemsize, row_align, max_block_rows, budget)
    nb = b_pad // tb

    partials = pl.pallas_call(
        _byol_tiled_kernel,
        out_shape=jax.ShapeDtypeStruct((1, 256), jnp.float32),
        grid=(2, nb, nd),
        in_specs=[
            # student: half p, row block j, D chunk k
            pl.BlockSpec((tb, td), lambda p, j, k: (p * nb + j, k)),
            # teacher: the *other* half -> s1.t2 / s2.t1 pairing via index_map
            pl.BlockSpec((tb, td), lambda p, j, k: ((1 - p) * nb + j, k)),
        ],
        out_specs=pl.BlockSpec((1, 128), lambda p, j, k: (0, p)),
        scratch_shapes=[
            pltpu.VMEM((tb, 1), jnp.float32),   # ss partials
            pltpu.VMEM((tb, 1), jnp.float32),   # tt partials
            pltpu.VMEM((tb, 1), jnp.float32),   # st partials
            pltpu.VMEM((1, 1), jnp.float32),    # per-half running sum(cos)
        ],
        compiler_params=pltpu.CompilerParams(
            dimension_semantics=("parallel", "arbitrary", "arbitrary"),
            vmem_limit_bytes=vmem_limit,
        ),
        cost_estimate=pl.CostEstimate(
            flops=6 * 2 * b_pad * d_pad,
            transcendentals=4 * b_pad,
            bytes_accessed=2 * (2 * b_pad) * d_pad * itemsize + 256 * 4,
        ),
        # NOTE: pipeline_mode=pl.Buffered(3) on the inputs is a marginal option
        # if a trace still shows DMA gaps between short steps; skipped to keep
        # VMEM headroom on v7x.
    )(student_output, teacher_output)

    total = partials[0, 0] + partials[0, 128]
    return (jnp.float32(4.0) - jnp.float32(2.0 / b) * total).astype(jnp.float32)


# --------------------------------------------------------------------------- #
# Pure-JAX reference (mirrors the PyTorch forward exactly)                    #
# --------------------------------------------------------------------------- #
def byol_loss_ref(student_output, teacher_output):
    b = student_output.shape[0] // 2
    s1, s2 = student_output[:b], student_output[b:]
    t1, t2 = teacher_output[:b], teacher_output[b:]

    def normalize(x):
        x = x.astype(jnp.float32)
        n = jnp.sqrt(jnp.sum(x * x, axis=-1, keepdims=True))
        return x / jnp.maximum(n, _EPS)

    s1, s2, t1, t2 = map(normalize, (s1, s2, t1, t2))
    loss_1 = 2.0 - 2.0 * jnp.sum(s1 * t2, axis=-1)
    loss_2 = 2.0 - 2.0 * jnp.sum(s2 * t1, axis=-1)
    return jnp.mean(loss_1 + loss_2)


if __name__ == "__main__":
    key = jax.random.PRNGKey(0)
    k1, k2, k3, k4, k5, k6 = jax.random.split(key, 6)

    # Primary path: B = 16 rows per view, D = 256 -> single block per half.
    B, D = 16, 256
    student = jax.random.normal(k1, (2 * B, D), dtype=jnp.float32)
    teacher = jax.random.normal(k2, (2 * B, D), dtype=jnp.float32)
    ref = jax.block_until_ready(byol_loss_ref(student, teacher))

    out = jax.block_until_ready(byol_loss(student, teacher))
    assert jnp.allclose(out, ref, atol=1e-5, rtol=1e-5), (out, ref)

    # Forced tiny budget: tb=8, td=128 -> grid (2, 2, 2); exercises the
    # row-block and D-chunk init / accumulate / finalize paths.
    out_small = jax.block_until_ready(
        byol_loss(student, teacher, max_block_rows=8, block_budget_bytes=30_000))
    assert jnp.allclose(out_small, ref, atol=1e-5, rtol=1e-5), (out_small, ref)

    # Ragged half-batch (b = 6): rows zero-padded to the sublane alignment;
    # padded rows contribute exactly zero, mean divides by the true B.
    Bo, Do = 6, 128
    student_o = jax.random.normal(k3, (2 * Bo, Do), dtype=jnp.float32)
    teacher_o = jax.random.normal(k4, (2 * Bo, Do), dtype=jnp.float32)
    out_o = jax.block_until_ready(byol_loss(student_o, teacher_o))
    ref_o = jax.block_until_ready(byol_loss_ref(student_o, teacher_o))
    assert jnp.allclose(out_o, ref_o, atol=1e-5, rtol=1e-5), (out_o, ref_o)

    # bf16 inputs (dtype-aware 16-row alignment; kernel upcasts to f32).
    student_h = jax.random.normal(k5, (2 * B, D), dtype=jnp.float32).astype(jnp.bfloat16)
    teacher_h = jax.random.normal(k6, (2 * B, D), dtype=jnp.float32).astype(jnp.bfloat16)
    out_h = jax.block_until_ready(byol_loss(student_h, teacher_h))
    ref_h = jax.block_until_ready(byol_loss_ref(student_h, teacher_h))
    assert jnp.allclose(out_h, ref_h, atol=1e-3, rtol=1e-3), (out_h, ref_h)

    print("KERNEL_OK")
</pallas_src>

<mosaic_0001>
module attributes {stable_mosaic.version = 11 : i64} {
  func.func @_byol_tiled_kernel(%arg0: i32, %arg1: i32, %arg2: i32, %arg3: memref<16x256xf32, #tpu.memory_space<vmem>>, %arg4: memref<16x256xf32, #tpu.memory_space<vmem>>, %arg5: memref<1x128xf32, #tpu.memory_space<vmem>>, %arg6: memref<16x1xf32, #tpu.memory_space<vmem>>, %arg7: memref<16x1xf32, #tpu.memory_space<vmem>>, %arg8: memref<16x1xf32, #tpu.memory_space<vmem>>, %arg9: memref<1x1xf32, #tpu.memory_space<vmem>>) attributes {dimension_semantics = [#tpu.dimension_semantics<parallel>, #tpu.dimension_semantics<arbitrary>, #tpu.dimension_semantics<arbitrary>], iteration_bounds = array<i64: 2, 1, 1>, scalar_prefetch = 0 : i64, scratch_operands = 4 : i64, tpu.core_type = #tpu.core_type<tc>, window_params = [{transform_indices = @transform_0, window_bounds = array<i64: 16, 256>}, {transform_indices = @transform_1, window_bounds = array<i64: 16, 256>}, {transform_indices = @transform_2, window_bounds = array<i64: 1, 128>}]} {
    %c0_i32 = arith.constant 0 : i32
    %0 = arith.cmpi eq, %arg1, %c0_i32 : i32
    %c0_i32_0 = arith.constant 0 : i32
    %1 = arith.cmpi eq, %arg2, %c0_i32_0 : i32
    %2 = arith.andi %0, %1 : i1
    %3 = arith.extui %2 : i1 to i32
    %c0_i32_1 = arith.constant 0 : i32
    %4 = arith.cmpi ne, %3, %c0_i32_1 : i32
    scf.if %4 {
      %cst_26 = arith.constant 0.000000e+00 : f32
      %36 = vector.broadcast %cst_26 : f32 to vector<1x1xf32>
      %c0_27 = arith.constant 0 : index
      %c0_28 = arith.constant 0 : index
      %37 = vector.load %arg9[%c0_27, %c0_28] : memref<1x1xf32, #tpu.memory_space<vmem>>, vector<1x1xf32>
      tpu.vector_store %arg9[%c0_27, %c0_28], %36 {strides = array<i32>} : memref<1x1xf32, #tpu.memory_space<vmem>>, vector<1x1xf32>,
    } else {
    }
    %c0_i32_2 = arith.constant 0 : i32
    %5 = arith.cmpi eq, %arg2, %c0_i32_2 : i32
    %6 = arith.extui %5 : i1 to i32
    %c0_i32_3 = arith.constant 0 : i32
    %7 = arith.cmpi ne, %6, %c0_i32_3 : i32
    scf.if %7 {
      %cst_26 = arith.constant 0.000000e+00 : f32
      %36 = vector.broadcast %cst_26 : f32 to vector<16x1xf32>
      %c0_27 = arith.constant 0 : index
      %c0_28 = arith.constant 0 : index
      %37 = vector.load %arg6[%c0_27, %c0_28] : memref<16x1xf32, #tpu.memory_space<vmem>>, vector<16x1xf32>
      tpu.vector_store %arg6[%c0_27, %c0_28], %36 {strides = array<i32>} : memref<16x1xf32, #tpu.memory_space<vmem>>, vector<16x1xf32>,
      %cst_29 = arith.constant 0.000000e+00 : f32
      %38 = vector.broadcast %cst_29 : f32 to vector<16x1xf32>
      %c0_30 = arith.constant 0 : index
      %c0_31 = arith.constant 0 : index
      %39 = vector.load %arg7[%c0_30, %c0_31] : memref<16x1xf32, #tpu.memory_space<vmem>>, vector<16x1xf32>
      tpu.vector_store %arg7[%c0_30, %c0_31], %38 {strides = array<i32>} : memref<16x1xf32, #tpu.memory_space<vmem>>, vector<16x1xf32>,
      %cst_32 = arith.constant 0.000000e+00 : f32
      %40 = vector.broadcast %cst_32 : f32 to vector<16x1xf32>
      %c0_33 = arith.constant 0 : index
      %c0_34 = arith.constant 0 : index
      %41 = vector.load %arg8[%c0_33, %c0_34] : memref<16x1xf32, #tpu.memory_space<vmem>>, vector<16x1xf32>
      tpu.vector_store %arg8[%c0_33, %c0_34], %40 {strides = array<i32>} : memref<16x1xf32, #tpu.memory_space<vmem>>, vector<16x1xf32>,
    } else {
    }
    %c0 = arith.constant 0 : index
    %c0_4 = arith.constant 0 : index
    %8 = vector.load %arg3[%c0, %c0_4] : memref<16x256xf32, #tpu.memory_space<vmem>>, vector<16x256xf32>
    %c0_5 = arith.constant 0 : index
    %c0_6 = arith.constant 0 : index
    %9 = vector.load %arg4[%c0_5, %c0_6] : memref<16x256xf32, #tpu.memory_space<vmem>>, vector<16x256xf32>
    %c0_7 = arith.constant 0 : index
    %c0_8 = arith.constant 0 : index
    %10 = vector.load %arg6[%c0_7, %c0_8] : memref<16x1xf32, #tpu.memory_space<vmem>>, vector<16x1xf32>
    %11 = arith.mulf %8, %8 : vector<16x256xf32>
    %cst = arith.constant dense<0.000000e+00> : vector<16xf32>
    %12 = vector.multi_reduction <add>, %11, %cst [1] : vector<16x256xf32> to vector<16xf32>
    %13 = vector.shape_cast %12 : vector<16xf32> to vector<16x1xf32>
    %14 = arith.addf %10, %13 : vector<16x1xf32>
    %c0_9 = arith.constant 0 : index
    %c0_10 = arith.constant 0 : index
    %15 = vector.load %arg6[%c0_9, %c0_10] : memref<16x1xf32, #tpu.memory_space<vmem>>, vector<16x1xf32>
    tpu.vector_store %arg6[%c0_9, %c0_10], %14 {strides = array<i32>} : memref<16x1xf32, #tpu.memory_space<vmem>>, vector<16x1xf32>,
    %c0_11 = arith.constant 0 : index
    %c0_12 = arith.constant 0 : index
    %16 = vector.load %arg7[%c0_11, %c0_12] : memref<16x1xf32, #tpu.memory_space<vmem>>, vector<16x1xf32>
    %17 = arith.mulf %9, %9 : vector<16x256xf32>
    %cst_13 = arith.constant dense<0.000000e+00> : vector<16xf32>
    %18 = vector.multi_reduction <add>, %17, %cst_13 [1] : vector<16x256xf32> to vector<16xf32>
    %19 = vector.shape_cast %18 : vector<16xf32> to vector<16x1xf32>
    %20 = arith.addf %16, %19 : vector<16x1xf32>
    %c0_14 = arith.constant 0 : index
    %c0_15 = arith.constant 0 : index
    %21 = vector.load %arg7[%c0_14, %c0_15] : memref<16x1xf32, #tpu.memory_space<vmem>>, vector<16x1xf32>
    tpu.vector_store %arg7[%c0_14, %c0_15], %20 {strides = array<i32>} : memref<16x1xf32, #tpu.memory_space<vmem>>, vector<16x1xf32>,
    %c0_16 = arith.constant 0 : index
    %c0_17 = arith.constant 0 : index
    %22 = vector.load %arg8[%c0_16, %c0_17] : memref<16x1xf32, #tpu.memory_space<vmem>>, vector<16x1xf32>
    %23 = arith.mulf %8, %9 : vector<16x256xf32>
    %cst_18 = arith.constant dense<0.000000e+00> : vector<16xf32>
    %24 = vector.multi_reduction <add>, %23, %cst_18 [1] : vector<16x256xf32> to vector<16xf32>
    %25 = vector.shape_cast %24 : vector<16xf32> to vector<16x1xf32>
    %26 = arith.addf %22, %25 : vector<16x1xf32>
    %c0_19 = arith.constant 0 : index
    %c0_20 = arith.constant 0 : index
    %27 = vector.load %arg8[%c0_19, %c0_20] : memref<16x1xf32, #tpu.memory_space<vmem>>, vector<16x1xf32>
    tpu.vector_store %arg8[%c0_19, %c0_20], %26 {strides = array<i32>} : memref<16x1xf32, #tpu.memory_space<vmem>>, vector<16x1xf32>,
    %c0_i32_21 = arith.constant 0 : i32
    %28 = arith.cmpi eq, %arg2, %c0_i32_21 : i32
    %29 = arith.extui %28 : i1 to i32
    %c0_i32_22 = arith.constant 0 : i32
    %30 = arith.cmpi ne, %29, %c0_i32_22 : i32
    scf.if %30 {
      %c0_26 = arith.constant 0 : index
      %c0_27 = arith.constant 0 : index
      %36 = vector.load %arg8[%c0_26, %c0_27] : memref<16x1xf32, #tpu.memory_space<vmem>>, vector<16x1xf32>
      %c0_28 = arith.constant 0 : index
      %c0_29 = arith.constant 0 : index
      %37 = vector.load %arg6[%c0_28, %c0_29] : memref<16x1xf32, #tpu.memory_space<vmem>>, vector<16x1xf32>
      %cst_30 = arith.constant 1.000000e-24 : f32
      %38 = vector.broadcast %cst_30 : f32 to vector<16x1xf32>
      %39 = arith.maximumf %37, %38 : vector<16x1xf32>
      %40 = math.rsqrt %39 : vector<16x1xf32>
      %41 = arith.mulf %36, %40 : vector<16x1xf32>
      %c0_31 = arith.constant 0 : index
      %c0_32 = arith.constant 0 : index
      %42 = vector.load %arg7[%c0_31, %c0_32] : memref<16x1xf32, #tpu.memory_space<vmem>>, vector<16x1xf32>
      %cst_33 = arith.constant 1.000000e-24 : f32
      %43 = vector.broadcast %cst_33 : f32 to vector<16x1xf32>
      %44 = arith.maximumf %42, %43 : vector<16x1xf32>
      %45 = math.rsqrt %44 : vector<16x1xf32>
      %46 = arith.mulf %41, %45 : vector<16x1xf32>
      %c0_34 = arith.constant 0 : index
      %c0_35 = arith.constant 0 : index
      %47 = vector.load %arg9[%c0_34, %c0_35] : memref<1x1xf32, #tpu.memory_space<vmem>>, vector<1x1xf32>
      %cst_36 = arith.constant dense<0.000000e+00> : vector<1xf32>
      %48 = vector.multi_reduction <add>, %46, %cst_36 [0] : vector<16x1xf32> to vector<1xf32>
      %49 = vector.shape_cast %48 : vector<1xf32> to vector<1x1xf32>
      %50 = arith.addf %47, %49 : vector<1x1xf32>
      %c0_37 = arith.constant 0 : index
      %c0_38 = arith.constant 0 : index
      %51 = vector.load %arg9[%c0_37, %c0_38] : memref<1x1xf32, #tpu.memory_space<vmem>>, vector<1x1xf32>
      tpu.vector_store %arg9[%c0_37, %c0_38], %50 {strides = array<i32>} : memref<1x1xf32, #tpu.memory_space<vmem>>, vector<1x1xf32>,
    } else {
    }
    %c0_i32_23 = arith.constant 0 : i32
    %31 = arith.cmpi eq, %arg1, %c0_i32_23 : i32
    %c0_i32_24 = arith.constant 0 : i32
    %32 = arith.cmpi eq, %arg2, %c0_i32_24 : i32
    %33 = arith.andi %31, %32 : i1
    %34 = arith.extui %33 : i1 to i32
    %c0_i32_25 = arith.constant 0 : i32
    %35 = arith.cmpi ne, %34, %c0_i32_25 : i32
    scf.if %35 {
      %c0_26 = arith.constant 0 : index
      %c0_27 = arith.constant 0 : index
      %36 = vector.load %arg9[%c0_26, %c0_27] : memref<1x1xf32, #tpu.memory_space<vmem>>, vector<1x1xf32>
      %37 = vector.shape_cast %36 : vector<1x1xf32> to vector<1x1xf32>
      %38 = vector.broadcast %37 : vector<1x1xf32> to vector<1x128xf32>
      %c0_28 = arith.constant 0 : index
      %c0_29 = arith.constant 0 : index
      %39 = vector.load %arg5[%c0_28, %c0_29] : memref<1x128xf32, #tpu.memory_space<vmem>>, vector<1x128xf32>
      tpu.vector_store %arg5[%c0_28, %c0_29], %38 {strides = array<i32>} : memref<1x128xf32, #tpu.memory_space<vmem>>, vector<1x128xf32>,
    } else {
    }
    return
  }
  func.func @transform_0(%arg0: i32, %arg1: i32, %arg2: i32) -> (i32, i32) {
    %c1_i32 = arith.constant 1 : i32
    %0 = arith.muli %arg0, %c1_i32 : i32
    %1 = arith.addi %0, %arg1 : i32
    %c0_i32 = arith.constant 0 : i32
    return %1, %arg2 : i32, i32
  }
  func.func @transform_1(%arg0: i32, %arg1: i32, %arg2: i32) -> (i32, i32) {
    %c1_i32 = arith.constant 1 : i32
    %0 = arith.subi %c1_i32, %arg0 : i32
    %c1_i32_0 = arith.constant 1 : i32
    %1 = arith.muli %0, %c1_i32_0 : i32
    %2 = arith.addi %1, %arg1 : i32
    %c0_i32 = arith.constant 0 : i32
    return %2, %arg2 : i32, i32
  }
  func.func @transform_2(%arg0: i32, %arg1: i32, %arg2: i32) -> (i32, i32) {
    %c0_i32 = arith.constant 0 : i32
    %c0_i32_0 = arith.constant 0 : i32
    return %c0_i32, %arg0 : i32, i32
  }
}

</mosaic_0001>

<llo_original>
// kernel: tpu_custom_call.1
$region0: #{tpu_custom_call.1}
  #allocation0 [shape = 'u32[]', space=smem, size = 0x4, offset = 0x4, fixed_abs, tag = 'smem constant byte address 0x4 - core index']
  #allocation1 [shape = 'u32[144,128]{1,0:T(1,128)}', space=vmem, size = 0x12000, scoped, tag = 'internal scratch']
  #allocation2 [shape = 'f32[16,1]{1,0:T(8,128)}', space=vmem, size = 0x2000, scoped, tag = 'scratch operand']
  #allocation3 [shape = 'f32[16,1]{1,0:T(8,128)}', space=vmem, size = 0x2000, scoped, tag = 'scratch operand']
  #allocation4 [shape = 'f32[16,1]{1,0:T(8,128)}', space=vmem, size = 0x2000, scoped, tag = 'scratch operand']
  #allocation5 [shape = 'f32[1,1]{1,0:T(1,128)}', space=vmem, size = 0x200, scoped, tag = 'scratch operand']
  %s0 = inlined_call_operand.hbm [shape: f32[32,256], index: 0, kind: input, shape index: {}]
  %s1 = inlined_call_operand.hbm [shape: f32[32,256], index: 1, kind: input, shape index: {}]
  %s2 = inlined_call_operand.hbm [shape: f32[1,256], index: 2, kind: output, shape index: {}]
  %s3 = sld [smem:[#allocation0]]
  $region65: #{tpu_custom_call.1} parent=0
    _
  %s5 = ssub.s32 1, %s3
  %s6 = scalar_select 0, %s5, %s3
  $region1: #{tpu_custom_call.1} parent=0
    #allocation6 [shape = 'u8[32768]{0}', space=vmem, size = 0x8000, scoped, tag = 'input window, operand 0']
    #allocation7 [shape = 's32[2]{0}', space=sflag, size = 0x8, scoped, tag = 'scoped memory for tpu_custom_call.1']
    #allocation8 [shape = 's32[2]{0}', space=sflag, size = 0x8, scoped, tag = 'scoped memory for tpu_custom_call.1']
    #allocation9 [shape = 'u8[32768]{0}', space=vmem, size = 0x8000, scoped, tag = 'input window, operand 1']
    #allocation10 [shape = 's32[2]{0}', space=sflag, size = 0x8, scoped, tag = 'scoped memory for tpu_custom_call.1']
    #allocation11 [shape = 'u8[1024]{0}', space=vmem, size = 0x400, scoped, tag = 'output window, operand 0']
    %7 = vsyncpa [#allocation7], 0
    %s8 = scalar_lea.sflag [#allocation7], 1
    %9 = vsyncpa %s8, 0
    %10 = vsyncpa [#allocation10], 0
    %s11 = scalar_lea.sflag [#allocation10], 1
    %12 = vsyncpa %s11, 0
    %13 = vsyncpa [#allocation8], 0
    %s14 = scalar_lea.sflag [#allocation8], 1
    %15 = vsyncpa %s14, 0
    loop: start=0, step=1, limit=4
    $region2: #{tpu_custom_call.1} parent=1 // loop_pre_header
      _
    $region3: #{tpu_custom_call.1} parent=1 // loop_header
      %s17 = sphi 0, %s21
      %p18 = scmp.ge.s32.totalorder %s17, 4
      %s24 = sphi 0, %s43
      %s25 = sphi 0, %s39
      %s26 = sphi 0, %s35
      %s27 = sphi 0, %s24
      %s28 = sphi 0, %s25
      %s29 = sphi 0, %s26
      %s30 = sphi 0, %s27
      %s31 = sphi 0, %s28
      %s32 = sphi 0, %s29
      %s50 = sphi 0, %s52
      %s53 = sphi 0, %s50
      %s54 = sphi 0, %s53
      %s70 = sphi 0, %s54
      %s82 = sphi 0, %s84
      %s85 = sphi 0, %s82
      %s86 = sphi 0, %s85
      %s102 = sphi 0, %s86
      %s108 = sphi 0, %s110
      %s111 = sphi 0, %s108
      %s112 = sphi 0, %s111
      %s128 = sphi 0, %s112
    $region4: #{tpu_custom_call.1} parent=1 // loop_header_branch
      %20 = sbr.rel (%p18) target = $region8
    $region5: #{tpu_custom_call.1} parent=1 // loop_body
      %s22 = ssub.s32 %s17, 1
      %s23 = ssub.s32 %s17, 2
      %s33 = sadd.s32 1, %s26
      %p34 = scmp.ge.s32.totalorder %s33, 1
      %s35 = scalar_select %p34, 0, %s33
      %s36 = sadd.s32 1, %s25
      %s37 = scalar_select %p34, %s36, %s25
      %p38 = scmp.ge.s32.totalorder %s37, 1
      %s39 = scalar_select %p38, 0, %s37
      %s40 = sadd.s32 1, %s24
      %s41 = scalar_select %p38, %s40, %s24
      %p42 = scmp.ge.s32.totalorder %s41, 2
      %s43 = scalar_select %p42, 0, %s41
      %s44 = sadd.s32 %s24, %s25
      %s45 = sadd.s32 %s43, %s39
      %s46 = ssub.s32 %s44, %s45
      %s47 = ssub.s32 %s26, %s35
      %s48 = sor.u32 %s46, %s47
      %p49 = scmp.eq.s32.totalorder %s48, 0
      %s51 = sadd.s32 %s50, 1
      %s52 = scalar_select %p49, %s50, %s51
      %p55 = pneg %p49
      %p56 = scmp.eq.s32.totalorder %s17, 1
      %p57 = por %p55, %p56
      %p58 = scmp.ne.s32.totalorder %s50, %s53
      %p59 = scmp.eq.s32.totalorder %s17, 0
      %p60 = por %p58, %p59
      %p61 = scmp.ne.s32.totalorder %s50, %s53
      %p62 = scmp.eq.s32.totalorder %s22, 1
      %p63 = por %p61, %p62
      %p64 = scmp.ne.s32.totalorder %s53, %s54
      %p65 = scmp.eq.s32.totalorder %s22, 0
      %p66 = por %p64, %p65
      %p67 = scmp.ne.s32.totalorder %s53, %s54
      %p68 = scmp.eq.s32.totalorder %s23, 1
      %p69 = por %p67, %p68
      %p71 = scmp.ne.s32.totalorder %s54, %s70
      %p72 = scmp.eq.s32.totalorder %s23, 0
      %p73 = por %p71, %p72
      %s74 = ssub.s32 1, %s24
      %s75 = sadd.s32 %s74, %s25
      %s76 = ssub.s32 1, %s43
      %s77 = sadd.s32 %s76, %s39
      %s78 = ssub.s32 %s75, %s77
      %s79 = ssub.s32 %s26, %s35
      %s80 = sor.u32 %s78, %s79
      %p81 = scmp.eq.s32.totalorder %s80, 0
      %s83 = sadd.s32 %s82, 1
      %s84 = scalar_select %p81, %s82, %s83
      %p87 = pneg %p81
      %p88 = scmp.eq.s32.totalorder %s17, 1
      %p89 = por %p87, %p88
      %p90 = scmp.ne.s32.totalorder %s82, %s85
      %p91 = scmp.eq.s32.totalorder %s17, 0
      %p92 = por %p90, %p91
      %p93 = scmp.ne.s32.totalorder %s82, %s85
      %p94 = scmp.eq.s32.totalorder %s22, 1
      %p95 = por %p93, %p94
      %p96 = scmp.ne.s32.totalorder %s85, %s86
      %p97 = scmp.eq.s32.totalorder %s22, 0
      %p98 = por %p96, %p97
      %p99 = scmp.ne.s32.totalorder %s85, %s86
      %p100 = scmp.eq.s32.totalorder %s23, 1
      %p101 = por %p99, %p100
      %p103 = scmp.ne.s32.totalorder %s86, %s102
      %p104 = scmp.eq.s32.totalorder %s23, 0
      %p105 = por %p103, %p104
      %s106 = ssub.s32 %s24, %s43
      %p107 = scmp.eq.s32.totalorder %s106, 0
      %s109 = sadd.s32 %s108, 1
      %s110 = scalar_select %p107, %s108, %s109
      %p113 = pneg %p107
      %p114 = scmp.eq.s32.totalorder %s17, 1
      %p115 = por %p113, %p114
      %p116 = scmp.ne.s32.totalorder %s108, %s111
      %p117 = scmp.eq.s32.totalorder %s17, 0
      %p118 = por %p116, %p117
      %p119 = scmp.ne.s32.totalorder %s108, %s111
      %p120 = scmp.eq.s32.totalorder %s22, 1
      %p121 = por %p119, %p120
      %p122 = scmp.ne.s32.totalorder %s111, %s112
      %p123 = scmp.eq.s32.totalorder %s22, 0
      %p124 = por %p122, %p123
      %p125 = scmp.ne.s32.totalorder %s111, %s112
      %p126 = scmp.eq.s32.totalorder %s23, 1
      %p127 = por %p125, %p126
      %p129 = scmp.ne.s32.totalorder %s112, %s128
      %p130 = scmp.eq.s32.totalorder %s23, 0
      %p131 = por %p129, %p130
      %p132 = scmp.le.s32.totalorder 1, %s17
      %p133 = scmp.lt.s32.totalorder %s17, 3
      %p134 = pnand %p132, %p133
      %p135 = pneg %p134
      // Predicated region
      $region9: #{tpu_custom_call.1} parent=5 // pred_check
        _
      $region10: #{tpu_custom_call.1} parent=5 // pred_check_branch
        %137 = sbr.rel (%p134) target = $region12
      $region11: #{tpu_custom_call.1} parent=5 // pred_region
        %s138 = ssub.s32 %s17, 1
      $region12: #{tpu_custom_call.1} parent=5 // pred_fallthru
        _
      %p139 = scmp.lt.s32.totalorder %s17, 2
      // Predicated region
      $region13: #{tpu_custom_call.1} parent=5 // pred_check
        %p140 = pneg %p139
      $region14: #{tpu_custom_call.1} parent=5 // pred_check_branch
        %142 = sbr.rel (%p140) target = $region16
      $region15: #{tpu_custom_call.1} parent=5 // pred_region
        // Predicated region
        $region17: #{tpu_custom_call.1} parent=15 // pred_check
          %p143 = pneg %p60
        $region18: #{tpu_custom_call.1} parent=15 // pred_check_branch
          %145 = sbr.rel (%p143) target = $region20
        $region19: #{tpu_custom_call.1} parent=15 // pred_region
          %s146 = sand.u32 %s50, 1
          %s147 = scalar_lea.sflag [#allocation7], %s146
          %s148 = sand.u32 %s50, 1
          %s149 = smul.addr %s148, 32
          %s150 = scalar_lea.vmem [#allocation6], %s149
          %s151 = sadd.s32 %s24, %s25
          %s152 = smul.u32 2, %s151
          %s153 = smul.u32 2, %s26
          %s155 = ssub.s32 512, 512
          %156 = vsyncadd %s147, %s155
          %s157 = smul.addr %s152, 2
          %s158 = sadd.s32 %s153, %s157
          %s159 = smul.addr %s158, 128
          %s160 = scalar_lea.hbm %s0, %s159
          %s161 = sshll.u32 %s150, 4
          %s162 = int_to_ptr.vmem [resolvable:$true] %s161
          %167 = dma.hbm_to_vmem [thread:$0]  %s160, 512, %s162, %s147, 256, 256, 16
        $region20: #{tpu_custom_call.1} parent=15 // pred_fallthru
          _
        // Predicated region
        $region21: #{tpu_custom_call.1} parent=15 // pred_check
          %p168 = pneg %p92
        $region22: #{tpu_custom_call.1} parent=15 // pred_check_branch
          %170 = sbr.rel (%p168) target = $region24
        $region23: #{tpu_custom_call.1} parent=15 // pred_region
          %s171 = sand.u32 %s82, 1
          %s172 = scalar_lea.sflag [#allocation10], %s171
          %s173 = sand.u32 %s82, 1
          %s174 = smul.addr %s173, 32
          %s175 = scalar_lea.vmem [#allocation9], %s174
          %s176 = ssub.s32 1, %s24
          %s177 = sadd.s32 %s176, %s25
          %s178 = smul.u32 2, %s177
          %s179 = smul.u32 2, %s26
          %s181 = ssub.s32 512, 512
          %182 = vsyncadd %s172, %s181
          %s183 = smul.addr %s178, 2
          %s184 = sadd.s32 %s179, %s183
          %s185 = smul.addr %s184, 128
          %s186 = scalar_lea.hbm %s1, %s185
          %s187 = sshll.u32 %s175, 4
          %s188 = int_to_ptr.vmem [resolvable:$true] %s187
          %193 = dma.hbm_to_vmem [thread:$0]  %s186, 512, %s188, %s172, 256, 256, 16
        $region24: #{tpu_custom_call.1} parent=15 // pred_fallthru
          _
      $region16: #{tpu_custom_call.1} parent=5 // pred_fallthru
        _
      %p194 = scmp.le.s32.totalorder 1, %s17
      %p195 = scmp.lt.s32.totalorder %s17, 3
      %p196 = pnand %p194, %p195
      %p197 = pneg %p196
      // Predicated region
      $region25: #{tpu_custom_call.1} parent=5 // pred_check
        _
      $region26: #{tpu_custom_call.1} parent=5 // pred_check_branch
        %199 = sbr.rel (%p196) target = $region28
      $region27: #{tpu_custom_call.1} parent=5 // pred_region
        %s200 = ssub.s32 %s17, 1
        %s201 = sand.u32 %s53, 1
        %s202 = scalar_lea.sflag [#allocation7], %s201
        %s203 = sand.u32 %s53, 1
        %s204 = smul.addr %s203, 32
        %s205 = scalar_lea.vmem [#allocation6], %s204
        // Predicated region
        $region29: #{tpu_custom_call.1} parent=27 // pred_check
          %p206 = pneg %p66
        $region30: #{tpu_custom_call.1} parent=27 // pred_check_branch
          %208 = sbr.rel (%p206) target = $region32
        $region31: #{tpu_custom_call.1} parent=27 // pred_region
          %209 = dma.done %s202, 512
        $region32: #{tpu_custom_call.1} parent=27 // pred_fallthru
          _
        %s210 = sand.u32 %s85, 1
        %s211 = scalar_lea.sflag [#allocation10], %s210
        %s212 = sand.u32 %s85, 1
        %s213 = smul.addr %s212, 32
        %s214 = scalar_lea.vmem [#allocation9], %s213
        // Predicated region
        $region33: #{tpu_custom_call.1} parent=27 // pred_check
          %p215 = pneg %p98
        $region34: #{tpu_custom_call.1} parent=27 // pred_check_branch
          %217 = sbr.rel (%p215) target = $region36
        $region35: #{tpu_custom_call.1} parent=27 // pred_region
          %218 = dma.done %s211, 512
        $region36: #{tpu_custom_call.1} parent=27 // pred_fallthru
          _
        %s219 = sand.u32 %s53, 1
        %s220 = scalar_lea.sflag [#allocation7], %s219
        %s221 = sand.u32 %s53, 1
        %s222 = smul.addr %s221, 32
        %s223 = scalar_lea.vmem [#allocation6], %s222
        %p224 = pneg %p66
        %p225 = pneg %p63
        %s226 = sand.u32 %s85, 1
        %s227 = scalar_lea.sflag [#allocation10], %s226
        %s228 = sand.u32 %s85, 1
        %s229 = smul.addr %s228, 32
        %s230 = scalar_lea.vmem [#allocation9], %s229
        %p231 = pneg %p98
        %p232 = pneg %p95
        %p233 = pneg %p124
        %p234 = pneg %p121
        %s235 = sand.u32 %s111, 1
        %s236 = scalar_lea.sflag [#allocation8], %s235
        %s237 = sand.u32 %s111, 1
        %s238 = scalar_lea.vmem [#allocation11], %s237
        %s239 = sadd.s32 %s27, %s28
        %s240 = smul.u32 2, %s239
        %s241 = smul.u32 2, %s29
        %s242 = ssub.s32 1, %s27
        %s243 = sadd.s32 %s242, %s28
        %s244 = smul.u32 2, %s243
        %s245 = smul.u32 2, %s29
        %p246 = scmp.eq.s32.totalorder %s28, 0
        %p247 = scmp.eq.s32.totalorder %s29, 0
        %p248 = pnand %p246, %p247
        %p249 = pneg %p248
        // Predicated region
        $region37: #{tpu_custom_call.1} parent=27 // pred_check
          _
        $region38: #{tpu_custom_call.1} parent=27 // pred_check_branch
          %251 = sbr.rel (%p248) target = $region40
        $region39: #{tpu_custom_call.1} parent=27 // pred_region
          %vm252 = vcmask 0
          %253 = vst.msk [vmem:[#allocation5] sm:$0x1] %vm252, 0.0
        $region40: #{tpu_custom_call.1} parent=27 // pred_fallthru
          _
        // Predicated region
        $region41: #{tpu_custom_call.1} parent=27 // pred_check
          %p254 = pneg %p247
        $region42: #{tpu_custom_call.1} parent=27 // pred_check_branch
          %256 = sbr.rel (%p254) target = $region44
        $region43: #{tpu_custom_call.1} parent=27 // pred_region
          %vm257 = vcmask 7168
          %258 = vst.msk [vmem:[#allocation2] sm:$0xff] %vm257, 0.0
          %259 = vst.msk [vmem:[#allocation2 + $0x8] sm:$0xff] %vm257, 0.0
          %260 = vst.msk [vmem:[#allocation3] sm:$0xff] %vm257, 0.0
          %261 = vst.msk [vmem:[#allocation3 + $0x8] sm:$0xff] %vm257, 0.0
          %262 = vst.msk [vmem:[#allocation4] sm:$0xff] %vm257, 0.0
          %263 = vst.msk [vmem:[#allocation4 + $0x8] sm:$0xff] %vm257, 0.0
        $region44: #{tpu_custom_call.1} parent=27 // pred_fallthru
          _
        %v264 = vld [vmem:[%s205] sm:$0xff]
        %v265 = vld [vmem:[%s205 + $0x8] sm:$0xff]
        %v266 = vld [vmem:[%s205 + $0x10] sm:$0xff]
        %v267 = vld [vmem:[%s205 + $0x18] sm:$0xff]
        %v268 = vld [vmem:[%s214] sm:$0xff]
        %v269 = vld [vmem:[%s214 + $0x8] sm:$0xff]
        %v270 = vld [vmem:[%s214 + $0x10] sm:$0xff]
        %v271 = vld [vmem:[%s214 + $0x18] sm:$0xff]
        %v272 = vld [vmem:[#allocation2] sm:$0xff]
        %v273 = vld [vmem:[#allocation2 + $0x8] sm:$0xff]
        %v274 = vmul.f32 %v264, %v264
        %v275 = vmul.f32 %v265, %v265
        %v276 = vmul.f32 %v266, %v266
        %v277 = vmul.f32 %v267, %v267
        %v278 = vadd.f32 %v274, %v275
        %279 = vadd.xlane.f32.xlu0 %v278
        %v280 = vpop.xlane.xlu0 %279
        %v281 = vadd.f32 %v276, %v277
        %282 = vadd.xlane.f32.xlu0 %v281
        %v283 = vpop.xlane.xlu0 %282
        %v284 = vadd.f32 %v272, %v280
        %v285 = vadd.f32 %v273, %v283
        %vm286 = vcmask 7168
        %287 = vst.msk [vmem:[#allocation2] sm:$0xff] %vm286, %v284
        %288 = vst.msk [vmem:[#allocation2 + $0x8] sm:$0xff] %vm286, %v285
        %v289 = vld [vmem:[#allocation3] sm:$0xff]
        %v290 = vld [vmem:[#allocation3 + $0x8] sm:$0xff]
        %v291 = vmul.f32 %v268, %v268
        %v292 = vmul.f32 %v269, %v269
        %v293 = vmul.f32 %v270, %v270
        %v294 = vmul.f32 %v271, %v271
        %v295 = vadd.f32 %v291, %v292
        %296 = vadd.xlane.f32.xlu0 %v295
        %v297 = vpop.xlane.xlu0 %296
        %v298 = vadd.f32 %v293, %v294
        %299 = vadd.xlane.f32.xlu0 %v298
        %v300 = vpop.xlane.xlu0 %299
        %v301 = vadd.f32 %v289, %v297
        %v302 = vadd.f32 %v290, %v300
        %303 = vst.msk [vmem:[#allocation3] sm:$0xff] %vm286, %v301
        %304 = vst.msk [vmem:[#allocation3 + $0x8] sm:$0xff] %vm286, %v302
        %v305 = vld [vmem:[#allocation4] sm:$0xff]
        %v306 = vld [vmem:[#allocation4 + $0x8] sm:$0xff]
        %v307 = vmul.f32 %v264, %v268
        %v308 = vmul.f32 %v265, %v269
        %v309 = vmul.f32 %v266, %v270
        %v310 = vmul.f32 %v267, %v271
        %v311 = vadd.f32 %v307, %v308
        %312 = vadd.xlane.f32.xlu0 %v311
        %v313 = vpop.xlane.xlu0 %312
        %v314 = vadd.f32 %v309, %v310
        %315 = vadd.xlane.f32.xlu0 %v314
        %v316 = vpop.xlane.xlu0 %315
        %v317 = vadd.f32 %v305, %v313
        %v318 = vadd.f32 %v306, %v316
        %319 = vst.msk [vmem:[#allocation4] sm:$0xff] %vm286, %v317
        %320 = vst.msk [vmem:[#allocation4 + $0x8] sm:$0xff] %vm286, %v318
        // Predicated region
        $region45: #{tpu_custom_call.1} parent=27 // pred_check
          %p321 = pneg %p247
        $region46: #{tpu_custom_call.1} parent=27 // pred_check_branch
          %323 = sbr.rel (%p321) target = $region48
        $region47: #{tpu_custom_call.1} parent=27 // pred_region
          %v324 = vld [vmem:[#allocation4] sm:$0xff]
          %v325 = vld [vmem:[#allocation4 + $0x8] sm:$0xff]
          %v326 = vld [vmem:[#allocation2] sm:$0xff]
          %v327 = vld [vmem:[#allocation2 + $0x8] sm:$0xff]
          %v328 = vmax.f32 %v326, 1e-24
          %v329 = vmax.f32 %v327, 1e-24
          %v330 = vrsqrt.pop %v328
          %v331 = vrsqrt.pop %v329
          %v332 = vmul.f32 %v324, %v330
          %v333 = vmul.f32 %v325, %v331
          %v334 = vld [vmem:[#allocation3] sm:$0xff]
          %v335 = vld [vmem:[#allocation3 + $0x8] sm:$0xff]
          %v336 = vmax.f32 %v334, 1e-24
          %v337 = vmax.f32 %v335, 1e-24
          %v338 = vrsqrt.pop %v336
          %v339 = vrsqrt.pop %v337
          %v340 = vmul.f32 %v332, %v338
          %v341 = vmul.f32 %v333, %v339
          %v342 = vld [vmem:[#allocation5] sm:$0x1]
          %v343 = vsel %vm286, %v340, 0.0
          %v344 = vsel %vm286, %v341, 0.0
          %v345 = vadd.f32 %v343, %v344
          %v346 = vrot.slane %v345, 4
          %v347 = vadd.f32 %v345, %v346
          %v348 = vrot.slane %v347, 2
          %v349 = vadd.f32 %v347, %v348
          %v350 = vrot.slane %v349, 1
          %v351 = vadd.f32 %v349, %v350
          %v352 = vadd.f32 %v342, %v351
          %vm353 = vcmask 0
          %354 = vst.msk [vmem:[#allocation5] sm:$0x1] %vm353, %v352
        $region48: #{tpu_custom_call.1} parent=27 // pred_fallthru
          _
        // Predicated region
        $region49: #{tpu_custom_call.1} parent=27 // pred_check
          _
        $region50: #{tpu_custom_call.1} parent=27 // pred_check_branch
          %356 = sbr.rel (%p248) target = $region52
        $region51: #{tpu_custom_call.1} parent=27 // pred_region
          %v357 = vld [vmem:[#allocation5] sm:$0x1]
          %359 = vset.pattern.permute.xlu0 0
          %360 = vperm.xlu0 %359, %v357
          %v361 = vpop.permute.xlu0 %360
          %v363 = vlaneseq
          %v364 = vshrl.u32 %v363, 7
          %v365 = vsub.s32 0, %v364
          %v366 = vrot.slane %v361, %v365
          %367 = vst [vmem:[%s238] sm:$0x1] %v366
        $region52: #{tpu_custom_call.1} parent=27 // pred_fallthru
          _
        %s368 = sand.u32 %s111, 1
        %s369 = scalar_lea.sflag [#allocation8], %s368
        %s370 = sand.u32 %s111, 1
        %s371 = scalar_lea.vmem [#allocation11], %s370
        // Predicated region
        $region53: #{tpu_custom_call.1} parent=27 // pred_check
          %p372 = pneg %p121
        $region54: #{tpu_custom_call.1} parent=27 // pred_check_branch
          %374 = sbr.rel (%p372) target = $region56
        $region55: #{tpu_custom_call.1} parent=27 // pred_region
          %s376 = ssub.s32 16, 16
          %377 = vsyncadd %s369, %s376
          %s378 = smul.addr %s27, 16
          %s379 = scalar_lea.hbm %s2, %s378
          %s381 = sshll.u32 %s371, 4
          %s382 = int_to_ptr.vmem [resolvable:$true] %s381
          %384 = dma.vmem_to_hbm [thread:$0]  %s382, 16, %s379, %s369
        $region56: #{tpu_custom_call.1} parent=27 // pred_fallthru
          _
      $region28: #{tpu_custom_call.1} parent=5 // pred_fallthru
        _
      %p385 = scmp.le.s32.totalorder 2, %s17
      // Predicated region
      $region57: #{tpu_custom_call.1} parent=5 // pred_check
        %p386 = pneg %p385
      $region58: #{tpu_custom_call.1} parent=5 // pred_check_branch
        %388 = sbr.rel (%p386) target = $region60
      $region59: #{tpu_custom_call.1} parent=5 // pred_region
        %s389 = ssub.s32 %s17, 2
        // Predicated region
        $region61: #{tpu_custom_call.1} parent=59 // pred_check
          %p390 = pneg %p127
        $region62: #{tpu_custom_call.1} parent=59 // pred_check_branch
          %392 = sbr.rel (%p390) target = $region64
        $region63: #{tpu_custom_call.1} parent=59 // pred_region
          %s393 = sand.u32 %s112, 1
          %s394 = scalar_lea.sflag [#allocation8], %s393
          %s395 = sand.u32 %s112, 1
          %s396 = scalar_lea.vmem [#allocation11], %s395
          %397 = dma.done %s394, 16
        $region64: #{tpu_custom_call.1} parent=59 // pred_fallthru
          _
      $region60: #{tpu_custom_call.1} parent=5 // pred_fallthru
        _
    $region6: #{tpu_custom_call.1} parent=1 // loop_footer
      %s21 = sadd.s32 1, %s17
    $region7: #{tpu_custom_call.1} parent=1 // loop_footer_branch
      %16 = sbr.rel target = $region3
    $region8: #{tpu_custom_call.1} parent=1 // loop_exit
      _
    %398 = vsyncpa [#allocation7], 1
    %s399 = scalar_lea.sflag [#allocation7], 1
    %400 = vsyncpa %s399, 1
    %401 = vsyncpa [#allocation10], 1
    %s402 = scalar_lea.sflag [#allocation10], 1
    %403 = vsyncpa %s402, 1
    %404 = vsyncpa [#allocation8], 1
    %s405 = scalar_lea.sflag [#allocation8], 1
    %406 = vsyncpa %s405, 1

</llo_original>
